<compile_context>
chip_gen: v6e
topology: v6e:2x2x1
jax: 0.10.0
libtpu: 0.0.40
codegen_flags: <defaults>
</compile_context>

<pallas_src>
import functools
import math

import jax
import jax.numpy as jnp
from jax.experimental import pallas as pl
from jax.experimental.pallas import tpu as pltpu


# ----------------------------------------------------------------------------
# Generation-aware tiling budgets (v7x: 64 MiB VMEM/TC; v5e/v6e: 128 MiB).
# ----------------------------------------------------------------------------
def _vmem_capacity_bytes():
    try:
        info = pltpu.get_tpu_info()
        return int(getattr(info, "vmem_capacity_bytes", 64 << 20))
    except Exception:
        return 64 << 20  # conservative fallback (assume the smallest, v7x-sized, VMEM)


_VMEM_BYTES = _vmem_capacity_bytes()
_SMALL_VMEM = _VMEM_BYTES <= (64 << 20)
_TM = 256 if _SMALL_VMEM else 512          # matmul row-tile target
_TN = 256 if _SMALL_VMEM else 512          # matmul col-tile target (v5e has 1 vst slot)
_TK = 512                                  # matmul contraction-tile target
_ATTN_TQ = 256                             # attention query-row tile target
_ATTN_W = 256                              # attention lane width (heads*head_dim) target
_VMEM_LIMIT = (48 << 20) if _SMALL_VMEM else (96 << 20)


def _cparams(dimension_semantics):
    return pltpu.CompilerParams(dimension_semantics=dimension_semantics,
                                vmem_limit_bytes=_VMEM_LIMIT)


def _isz(dt):
    return jnp.dtype(dt).itemsize


def _pick_tile(dim, target, align):
    """Largest multiple of `align` <= target that evenly tiles `dim`, else the full dim."""
    if dim <= target:
        return dim
    best = None
    t = align
    while t <= target:
        if dim % t == 0:
            best = t
        t += align
    # TODO(synk): pad ragged dims instead of falling back to a full-dim block.
    return best if best is not None else dim


def _pick_head_width(total_cols, head_dim, target):
    """Lane width per attention program: a multiple of head_dim that tiles total_cols
    exactly and is 128-lane aligned; falls back to the full width for tiny problems.
    head_dim=128 is the MXU sweet spot on v6e/v7x (256-wide arrays)."""
    best = None
    w = head_dim
    limit = min(total_cols, target)
    while w <= limit:
        if total_cols % w == 0 and w % 128 == 0:
            best = w
        w += head_dim
    return best if best is not None else total_cols


# ----------------------------------------------------------------------------
# Tiled matmul + bias:  out = x @ w + b      (generic fallback / unfused-FFN path)
# ----------------------------------------------------------------------------
def _matmul_bias_kernel(x_ref, w_ref, b_ref, o_ref, acc_ref):
    @pl.when(pl.program_id(2) == 0)
    def _init():
        acc_ref[...] = jnp.zeros_like(acc_ref)

    acc_ref[...] += jnp.dot(x_ref[...], w_ref[...], preferred_element_type=jnp.float32)

    @pl.when(pl.program_id(2) == pl.num_programs(2) - 1)
    def _finalize():
        o_ref[...] = (acc_ref[...] + b_ref[...].astype(jnp.float32)).astype(o_ref.dtype)


def linear_bias(x, w, b, *, out_dtype=None):
    M, K = x.shape
    K2, N = w.shape
    assert K2 == K
    if out_dtype is None:
        out_dtype = x.dtype
    tm = _pick_tile(M, _TM, 8)
    tn = _pick_tile(N, _TN, 128)
    tk = _pick_tile(K, _TK, 128)
    grid = (M // tm, N // tn, K // tk)
    cost = pl.CostEstimate(
        flops=2 * M * N * K, transcendentals=0,
        bytes_accessed=M * K * _isz(x.dtype) + K * N * _isz(w.dtype) + M * N * _isz(out_dtype))
    return pl.pallas_call(
        _matmul_bias_kernel,
        out_shape=jax.ShapeDtypeStruct((M, N), out_dtype),
        grid=grid,
        in_specs=[
            pl.BlockSpec((tm, tk), lambda i, j, k: (i, k)),
            pl.BlockSpec((tk, tn), lambda i, j, k: (k, j)),
            pl.BlockSpec((1, tn), lambda i, j, k: (0, j)),
        ],
        out_specs=pl.BlockSpec((tm, tn), lambda i, j, k: (i, j)),
        scratch_shapes=[pltpu.VMEM((tm, tn), jnp.float32)],
        compiler_params=_cparams(("parallel", "parallel", "arbitrary")),
        cost_estimate=cost,
    )(x, w, b.reshape(1, N))


# ----------------------------------------------------------------------------
# Fused Q/K/V projection: ONE pallas_call, x streamed once, three outputs.
# Grid (M//tm, K//tk); N = 3E kept un-tiled so x is read only once per row tile.
# ----------------------------------------------------------------------------
def _qkv_kernel(x_ref, w_ref, b_ref, q_ref, k_ref, v_ref, acc_ref, *, d_model):
    @pl.when(pl.program_id(1) == 0)
    def _init():
        acc_ref[...] = jnp.zeros_like(acc_ref)

    acc_ref[...] += jnp.dot(x_ref[...], w_ref[...], preferred_element_type=jnp.float32)

    @pl.when(pl.program_id(1) == pl.num_programs(1) - 1)
    def _finalize():
        z = acc_ref[...] + b_ref[...].astype(jnp.float32)
        q_ref[...] = z[:, :d_model].astype(q_ref.dtype)
        k_ref[...] = z[:, d_model:2 * d_model].astype(k_ref.dtype)
        v_ref[...] = z[:, 2 * d_model:].astype(v_ref.dtype)


def qkv_projection(x, w_qkv, b_qkv, w_q, w_k, w_v, b_q, b_k, b_v, *, out_dtype=None):
    M, K = x.shape
    N3 = w_qkv.shape[1]
    E = N3 // 3
    if out_dtype is None:
        out_dtype = x.dtype
    tm = _pick_tile(M, _TM, 8)
    tk = _pick_tile(K, _TK, 128)
    xb, wb, ob = _isz(x.dtype), _isz(w_qkv.dtype), _isz(out_dtype)
    budget = int(0.8 * _VMEM_LIMIT)

    def fits(tk_):
        return (2 * tm * tk_ * xb + 2 * tk_ * N3 * wb + tm * N3 * 4
                + 3 * 2 * tm * E * ob) <= budget

    while (not fits(tk)) and tk > 128 and tk % 2 == 0 and K % (tk // 2) == 0:
        tk //= 2
    if not fits(tk):
        # Very large E: fall back to three independently tiled projections.
        return (linear_bias(x, w_q, b_q, out_dtype=out_dtype),
                linear_bias(x, w_k, b_k, out_dtype=out_dtype),
                linear_bias(x, w_v, b_v, out_dtype=out_dtype))

    grid = (M // tm, K // tk)
    shp = jax.ShapeDtypeStruct((M, E), out_dtype)
    cost = pl.CostEstimate(
        flops=2 * M * N3 * K, transcendentals=0,
        bytes_accessed=M * K * xb + K * N3 * wb + M * N3 * ob)
    out_spec = pl.BlockSpec((tm, E), lambda i, k: (i, 0))
    return pl.pallas_call(
        functools.partial(_qkv_kernel, d_model=E),
        out_shape=(shp, shp, shp),
        grid=grid,
        in_specs=[
            pl.BlockSpec((tm, tk), lambda i, k: (i, k)),
            pl.BlockSpec((tk, N3), lambda i, k: (k, 0)),
            pl.BlockSpec((1, N3), lambda i, k: (0, 0)),
        ],
        out_specs=(out_spec, out_spec, out_spec),
        scratch_shapes=[pltpu.VMEM((tm, N3), jnp.float32)],
        compiler_params=_cparams(("parallel", "arbitrary")),
        cost_estimate=cost,
    )(x, w_qkv, b_qkv.reshape(1, N3))


# ----------------------------------------------------------------------------
# Tiled matmul with fused epilogue:  out = LayerNorm(residual + x @ w + b)
# Grid (M//tm, K//tk); N un-tiled so LayerNorm sees the whole feature row.
# ----------------------------------------------------------------------------
def _matmul_bias_res_ln_kernel(x_ref, w_ref, b_ref, res_ref, g_ref, beta_ref,
                               o_ref, acc_ref, *, eps):
    @pl.when(pl.program_id(1) == 0)
    def _init():
        acc_ref[...] = jnp.zeros_like(acc_ref)

    acc_ref[...] += jnp.dot(x_ref[...], w_ref[...], preferred_element_type=jnp.float32)

    @pl.when(pl.program_id(1) == pl.num_programs(1) - 1)
    def _finalize():
        z = (acc_ref[...] + b_ref[...].astype(jnp.float32)
             + res_ref[...].astype(jnp.float32))
        mean = jnp.mean(z, axis=-1, keepdims=True)
        cent = z - mean
        var = jnp.mean(cent * cent, axis=-1, keepdims=True)
        zn = cent * jax.lax.rsqrt(var + eps)
        o_ref[...] = (zn * g_ref[...].astype(jnp.float32)
                      + beta_ref[...].astype(jnp.float32)).astype(o_ref.dtype)


def linear_bias_residual_layernorm(x, w, b, residual, gamma, beta, eps, *, out_dtype=None):
    M, K = x.shape
    K2, N = w.shape
    assert K2 == K and residual.shape == (M, N)
    if out_dtype is None:
        out_dtype = residual.dtype
    tm = _pick_tile(M, _TM, 8)
    tk = _pick_tile(K, _TK, 128)
    xb, wb, rb, ob = _isz(x.dtype), _isz(w.dtype), _isz(residual.dtype), _isz(out_dtype)
    budget = int(0.8 * _VMEM_LIMIT)

    def fits(tm_, tk_):
        return (2 * tm_ * tk_ * xb + 2 * tk_ * N * wb + tm_ * N * 4
                + 2 * tm_ * N * rb + 2 * tm_ * N * ob + 6 * N * 4) <= budget

    while (not fits(tm, tk)) and tk > 128 and tk % 2 == 0 and K % (tk // 2) == 0:
        tk //= 2
    while (not fits(tm, tk)) and tm > 8 and tm % 2 == 0 and M % (tm // 2) == 0:
        tm //= 2
    # TODO(synk): once buffer_count=1 is supported, pipeline_mode=pl.Buffered(1) on the
    #             k-invariant res/bias/gamma/beta specs would save another ~tm*N*4 bytes.

    grid = (M // tm, K // tk)
    cost = pl.CostEstimate(
        flops=2 * M * N * K, transcendentals=2 * M,
        bytes_accessed=M * K * xb + K * N * wb + M * N * rb + M * N * ob)
    return pl.pallas_call(
        functools.partial(_matmul_bias_res_ln_kernel, eps=eps),
        out_shape=jax.ShapeDtypeStruct((M, N), out_dtype),
        grid=grid,
        in_specs=[
            pl.BlockSpec((tm, tk), lambda i, k: (i, k)),
            pl.BlockSpec((tk, N), lambda i, k: (k, 0)),
            pl.BlockSpec((1, N), lambda i, k: (0, 0)),
            pl.BlockSpec((tm, N), lambda i, k: (i, 0)),
            pl.BlockSpec((1, N), lambda i, k: (0, 0)),
            pl.BlockSpec((1, N), lambda i, k: (0, 0)),
        ],
        out_specs=pl.BlockSpec((tm, N), lambda i, k: (i, 0)),
        scratch_shapes=[pltpu.VMEM((tm, N), jnp.float32)],
        compiler_params=_cparams(("parallel", "arbitrary")),
        cost_estimate=cost,
    )(x, w.astype(w.dtype), b.reshape(1, N), residual, gamma.reshape(1, N), beta.reshape(1, N))


# ----------------------------------------------------------------------------
# Scaled-dot-product attention on head-packed [S, B*H*hd] activations.
# Grid = (head groups, query-row tiles): K/V of a group stay resident across q tiles,
# the group axis is "parallel" (sharded across v7x's two TensorCores with disjoint KV
# working sets), the q axis "arbitrary". Softmax is normalized AFTER the PV matmul and
# the per-head outputs are concatenated so the output store is a single lane-dense vst.
# ----------------------------------------------------------------------------
def _attention_kernel(q_ref, k_ref, v_ref, o_ref, *, head_dim, scale, approx_recip):
    qb = q_ref[...]                                     # [tq, w]
    kb = k_ref[...]                                     # [S,  w]
    vb = v_ref[...]                                     # [S,  w]
    n_heads = qb.shape[-1] // head_dim
    outs = []
    for h in range(n_heads):                            # static unroll over packed heads
        c0 = h * head_dim
        qh = qb[:, c0:c0 + head_dim]
        kh = kb[:, c0:c0 + head_dim]
        vh = vb[:, c0:c0 + head_dim]
        # q @ k^T by contracting the head axis of both operands (no transpose op), f32 acc.
        s = jax.lax.dot_general(qh, kh, (((1,), (1,)), ((), ())),
                                preferred_element_type=jnp.float32) * scale
        s = s - jnp.max(s, axis=-1, keepdims=True)      # stable softmax
        p = jnp.exp(s)
        l = jnp.sum(p, axis=-1, keepdims=True)          # [tq, 1]
        oh = jnp.dot(p.astype(vh.dtype), vh, preferred_element_type=jnp.float32)
        inv = pl.reciprocal(l, approx=True) if approx_recip else 1.0 / l
        outs.append(oh * inv)                           # normalize after PV: [tq, hd] multiply
    o = outs[0] if n_heads == 1 else jnp.concatenate(outs, axis=-1)
    o_ref[...] = o.astype(o_ref.dtype)                  # single full-width lane-dense store
    # TODO(synk): flash-style KV tiling (online softmax) so VMEM stops scaling with S (v7x).


def attention(q, k, v, *, head_dim, out_dtype=None, approx_recip=True):
    S, C = q.shape
    if out_dtype is None:
        out_dtype = q.dtype
    w = _pick_head_width(C, head_dim, _ATTN_W)
    in_b, out_b = _isz(q.dtype), _isz(out_dtype)
    tq = _pick_tile(S, _ATTN_TQ, 8)

    def footprint(tq_):                                 # rough per-program VMEM estimate
        return (4 * S * w * in_b                        # double-buffered K and V blocks
                + 2 * tq_ * w * (in_b + out_b)          # q and o blocks
                + 3 * tq_ * S * 4)                      # f32 score/prob temporaries

    budget = int(0.7 * _VMEM_LIMIT)
    while footprint(tq) > budget and tq > 8 and tq % 2 == 0 and S % (tq // 2) == 0:
        tq //= 2

    n_heads_total = C // head_dim
    cost = pl.CostEstimate(
        flops=4 * n_heads_total * S * S * head_dim,
        transcendentals=n_heads_total * S * S,
        bytes_accessed=3 * S * C * in_b + S * C * out_b)
    grid = (C // w, S // tq)                            # q-tile innermost -> K/V stay resident
    q_spec = pl.BlockSpec((tq, w), lambda g, i: (i, g))
    kv_spec = pl.BlockSpec((S, w), lambda g, i: (0, g))
    return pl.pallas_call(
        functools.partial(_attention_kernel, head_dim=head_dim,
                          scale=1.0 / math.sqrt(head_dim), approx_recip=approx_recip),
        out_shape=jax.ShapeDtypeStruct((S, C), out_dtype),
        grid=grid,
        in_specs=[q_spec, kv_spec, kv_spec],
        out_specs=q_spec,
        compiler_params=_cparams(("parallel", "arbitrary")),
        cost_estimate=cost,
    )(q, k, v)


# ----------------------------------------------------------------------------
# Parameter init (mirrors the torch module's shapes / init) and one-time preparation.
# ----------------------------------------------------------------------------
def init_params(key, d_model, dim_feedforward):
    ks = jax.random.split(key, 6)
    lim_in = math.sqrt(6.0 / (3 * d_model + d_model))   # xavier_uniform_ on [3E, E]
    inv_e = 1.0 / math.sqrt(d_model)
    inv_f = 1.0 / math.sqrt(dim_feedforward)
    return {
        "in_proj_w": jax.random.uniform(ks[0], (3 * d_model, d_model), jnp.float32, -lim_in, lim_in),
        "in_proj_b": jnp.zeros((3 * d_model,), jnp.float32),
        "out_proj_w": jax.random.uniform(ks[1], (d_model, d_model), jnp.float32, -inv_e, inv_e),
        "out_proj_b": jnp.zeros((d_model,), jnp.float32),
        "line1_w": jax.random.uniform(ks[2], (dim_feedforward, d_model), jnp.float32, -inv_e, inv_e),
        "line1_b": jax.random.uniform(ks[3], (dim_feedforward,), jnp.float32, -inv_e, inv_e),
        "line2_w": jax.random.uniform(ks[4], (d_model, dim_feedforward), jnp.float32, -inv_f, inv_f),
        "line2_b": jax.random.uniform(ks[5], (d_model,), jnp.float32, -inv_f, inv_f),
        "norm1_g": jnp.ones((d_model,), jnp.float32),
        "norm1_b": jnp.zeros((d_model,), jnp.float32),
        "norm2_g": jnp.ones((d_model,), jnp.float32),
        "norm2_b": jnp.zeros((d_model,), jnp.float32),
    }


def prepare_params(params, mxu_dtype=None):
    """One-time weight preparation (NOT per forward call):
    - transpose every weight once instead of a per-call .T,
    - stack Wq|Wk|Wv into one [E,3E] weight for the fused QKV projection (individual
      weights kept only for the huge-E fallback path),
    - optionally cast matmul weights to `mxu_dtype` (bf16) once; biases/LN stay f32,
    - collapse the activation-free FFN line2(line1(x)) into a single [E,E] matmul
      (re-association only; the reference forward never applies self.activate)."""
    E = params["out_proj_w"].shape[0]

    def wc(a):
        return a if mxu_dtype is None else a.astype(mxu_dtype)

    w_in_t = params["in_proj_w"].T                      # [E, 3E]
    b_in = params["in_proj_b"]
    w1_t = params["line1_w"].T                          # [E, dff]
    w2_t = params["line2_w"].T                          # [dff, E]
    w_ff = w1_t @ w2_t                                  # computed once in f32
    b_ff = params["line1_b"] @ w2_t + params["line2_b"]
    return {
        "mxu_dtype": mxu_dtype,
        "w_qkv": wc(w_in_t), "b_qkv": b_in,
        "wq": wc(w_in_t[:, :E]), "wk": wc(w_in_t[:, E:2 * E]), "wv": wc(w_in_t[:, 2 * E:]),
        "bq": b_in[:E], "bk": b_in[E:2 * E], "bv": b_in[2 * E:],
        "wo": wc(params["out_proj_w"].T), "bo": params["out_proj_b"],
        "w1": wc(w1_t), "b1": params["line1_b"],
        "w2": wc(w2_t), "b2": params["line2_b"],
        "w_ff": wc(w_ff), "b_ff": b_ff,
        "norm1_g": params["norm1_g"], "norm1_b": params["norm1_b"],
        "norm2_g": params["norm2_g"], "norm2_b": params["norm2_b"],
    }


# ----------------------------------------------------------------------------
# Full forward pass.
# ----------------------------------------------------------------------------
def transformer_encode_layer(X, prepared, n_head, layer_norm_eps=1e-5, fuse_ffn=True):
    S, B, E = X.shape
    hd = E // n_head
    assert hd * n_head == E
    M = S * B
    p = prepared
    mxu_dtype = p["mxu_dtype"]
    act_dt = X.dtype if mxu_dtype is None else mxu_dtype
    approx = mxu_dtype is not None          # exact reciprocal on the f32 reference path

    def c(a):                               # cast matmul inputs only; residual/LN stay f32
        return a if mxu_dtype is None else a.astype(mxu_dtype)

    x2d = X.reshape(M, E)

    # --- fused Q/K/V projection (x streamed once; outputs are head-packed after a free reshape) ---
    q, k, v = qkv_projection(c(x2d), p["w_qkv"], p["b_qkv"],
                             p["wq"], p["wk"], p["wv"], p["bq"], p["bk"], p["bv"],
                             out_dtype=act_dt)

    attn = attention(q.reshape(S, B * E), k.reshape(S, B * E), v.reshape(S, B * E),
                     head_dim=hd, out_dtype=act_dt, approx_recip=approx)        # [S, B*E]
    attn2d = attn.reshape(M, E)

    # --- out_proj + residual + LayerNorm fused into one kernel (dropout1 == identity) ---
    out = linear_bias_residual_layernorm(attn2d, p["wo"], p["bo"], x2d,
                                         p["norm1_g"], p["norm1_b"], layer_norm_eps,
                                         out_dtype=X.dtype)

    # --- feed forward (NO activation in the reference) + residual + LayerNorm ---
    if fuse_ffn:
        out2 = linear_bias_residual_layernorm(c(out), p["w_ff"], p["b_ff"], out,
                                              p["norm2_g"], p["norm2_b"], layer_norm_eps,
                                              out_dtype=X.dtype)
    else:
        h = linear_bias(c(out), p["w1"], p["b1"], out_dtype=act_dt)
        out2 = linear_bias_residual_layernorm(h, p["w2"], p["b2"], out,
                                              p["norm2_g"], p["norm2_b"], layer_norm_eps,
                                              out_dtype=X.dtype)
    return out2.reshape(S, B, E)


# ----------------------------------------------------------------------------
# Pure-JAX reference (mirrors the torch forward exactly) for tolerance checks.
# ----------------------------------------------------------------------------
def _reference_forward(X, params, n_head, eps=1e-5):
    S, B, E = X.shape
    hd = E // n_head
    x = X.reshape(S * B, E)
    qkv = x @ params["in_proj_w"].T + params["in_proj_b"]
    q, k, v = jnp.split(qkv, 3, axis=-1)

    def heads(t):
        return t.reshape(S, B * n_head, hd).transpose(1, 0, 2)

    q, k, v = heads(q) / math.sqrt(hd), heads(k), heads(v)
    a = jax.nn.softmax(q @ k.transpose(0, 2, 1), axis=-1)
    attn = (a @ v).transpose(1, 0, 2).reshape(S * B, E)
    attn = attn @ params["out_proj_w"].T + params["out_proj_b"]

    def ln(z, g, b):
        m = z.mean(-1, keepdims=True)
        cent = z - m
        return cent * jax.lax.rsqrt((cent * cent).mean(-1, keepdims=True) + eps) * g + b

    out = ln(x + attn, params["norm1_g"], params["norm1_b"])
    h = out @ params["line1_w"].T + params["line1_b"]
    h = h @ params["line2_w"].T + params["line2_b"]
    out2 = ln(out + h, params["norm2_g"], params["norm2_b"])
    return out2.reshape(S, B, E)


if __name__ == "__main__":
    S, B, D_MODEL, N_HEAD, DIM_FF = 8, 2, 32, 4, 64

    key = jax.random.PRNGKey(0)
    kx, kp = jax.random.split(key)
    X = jax.random.normal(kx, (S, B, D_MODEL), dtype=jnp.float32)
    params = init_params(kp, D_MODEL, DIM_FF)
    ref = _reference_forward(X, params, N_HEAD)

    # Path 1: exact-numerics path (f32 MXU inputs, exact reciprocal, un-collapsed FFN)
    #         -> tight tolerance against the pure-JAX reference.
    prep_f32 = prepare_params(params, mxu_dtype=None)
    out_f32 = jax.block_until_ready(
        transformer_encode_layer(X, prep_f32, N_HEAD, fuse_ffn=False))
    assert out_f32.shape == (S, B, D_MODEL)
    assert bool(jnp.all(jnp.isfinite(out_f32)))
    err_f32 = float(jnp.max(jnp.abs(out_f32 - ref)))
    assert err_f32 < 1e-3, f"f32 path max abs error too large: {err_f32}"

    # Path 2: performance path (bf16 MXU inputs, approx EUP reciprocal, collapsed FFN)
    #         -> looser, bf16-appropriate tolerance.
    prep_bf16 = prepare_params(params, mxu_dtype=jnp.bfloat16)
    out_bf16 = jax.block_until_ready(
        transformer_encode_layer(X, prep_bf16, N_HEAD, fuse_ffn=True))
    assert out_bf16.shape == (S, B, D_MODEL)
    assert bool(jnp.all(jnp.isfinite(out_bf16)))
    err_bf16 = float(jnp.max(jnp.abs(out_bf16 - ref)))
    assert err_bf16 < 1e-1, f"bf16 path max abs error too large: {err_bf16}"

    print("KERNEL_OK")
</pallas_src>

<mosaic_0001>
module attributes {stable_mosaic.version = 11 : i64} {
  func.func @_qkv_kernel(%arg0: i32, %arg1: i32, %arg2: memref<16x32xf32, #tpu.memory_space<vmem>>, %arg3: memref<32x96xf32, #tpu.memory_space<vmem>>, %arg4: memref<1x96xf32, #tpu.memory_space<vmem>>, %arg5: memref<16x32xf32, #tpu.memory_space<vmem>>, %arg6: memref<16x32xf32, #tpu.memory_space<vmem>>, %arg7: memref<16x32xf32, #tpu.memory_space<vmem>>, %arg8: memref<16x96xf32, #tpu.memory_space<vmem>>) attributes {dimension_semantics = [#tpu.dimension_semantics<parallel>, #tpu.dimension_semantics<arbitrary>], iteration_bounds = array<i64: 1, 1>, scalar_prefetch = 0 : i64, scratch_operands = 1 : i64, tpu.core_type = #tpu.core_type<tc>, window_params = [{transform_indices = @transform_0, window_bounds = array<i64: 16, 32>}, {transform_indices = @transform_1, window_bounds = array<i64: 32, 96>}, {pipeline_mode = #tpu.pipeline_mode<synchronous>, transform_indices = @transform_2, window_bounds = array<i64: 1, 96>}, {transform_indices = @transform_3, window_bounds = array<i64: 16, 32>}, {transform_indices = @transform_4, window_bounds = array<i64: 16, 32>}, {transform_indices = @transform_5, window_bounds = array<i64: 16, 32>}]} {
    %c0_i32 = arith.constant 0 : i32
    %0 = arith.cmpi eq, %arg1, %c0_i32 : i32
    %1 = arith.extui %0 : i1 to i32
    %c0_i32_0 = arith.constant 0 : i32
    %2 = arith.cmpi ne, %1, %c0_i32_0 : i32
    scf.if %2 {
      %cst_10 = arith.constant 0.000000e+00 : f32
      %12 = vector.broadcast %cst_10 : f32 to vector<16x96xf32>
      %c0_11 = arith.constant 0 : index
      %c0_12 = arith.constant 0 : index
      %13 = vector.load %arg8[%c0_11, %c0_12] : memref<16x96xf32, #tpu.memory_space<vmem>>, vector<16x96xf32>
      tpu.vector_store %arg8[%c0_11, %c0_12], %12 {strides = array<i32>} : memref<16x96xf32, #tpu.memory_space<vmem>>, vector<16x96xf32>,
    } else {
    }
    %c0 = arith.constant 0 : index
    %c0_1 = arith.constant 0 : index
    %3 = vector.load %arg8[%c0, %c0_1] : memref<16x96xf32, #tpu.memory_space<vmem>>, vector<16x96xf32>
    %c0_2 = arith.constant 0 : index
    %c0_3 = arith.constant 0 : index
    %4 = vector.load %arg2[%c0_2, %c0_3] : memref<16x32xf32, #tpu.memory_space<vmem>>, vector<16x32xf32>
    %c0_4 = arith.constant 0 : index
    %c0_5 = arith.constant 0 : index
    %5 = vector.load %arg3[%c0_4, %c0_5] : memref<32x96xf32, #tpu.memory_space<vmem>>, vector<32x96xf32>
    %cst = arith.constant dense<0.000000e+00> : vector<16x96xf32>
    %6 = tpu.matmul %4, %5, %cst {dimension_numbers = #tpu.dot_dimension_numbers<[1], [0], [0], [1], [0, 0, 1, 1], [], []>} : vector<16x32xf32>, vector<32x96xf32>, vector<16x96xf32> -> vector<16x96xf32>
    %7 = arith.addf %3, %6 : vector<16x96xf32>
    %c0_6 = arith.constant 0 : index
    %c0_7 = arith.constant 0 : index
    %8 = vector.load %arg8[%c0_6, %c0_7] : memref<16x96xf32, #tpu.memory_space<vmem>>, vector<16x96xf32>
    tpu.vector_store %arg8[%c0_6, %c0_7], %7 {strides = array<i32>} : memref<16x96xf32, #tpu.memory_space<vmem>>, vector<16x96xf32>,
    %c0_i32_8 = arith.constant 0 : i32
    %9 = arith.cmpi eq, %arg1, %c0_i32_8 : i32
    %10 = arith.extui %9 : i1 to i32
    %c0_i32_9 = arith.constant 0 : i32
    %11 = arith.cmpi ne, %10, %c0_i32_9 : i32
    scf.if %11 {
      %c0_10 = arith.constant 0 : index
      %c0_11 = arith.constant 0 : index
      %12 = vector.load %arg8[%c0_10, %c0_11] : memref<16x96xf32, #tpu.memory_space<vmem>>, vector<16x96xf32>
      %c0_12 = arith.constant 0 : index
      %c0_13 = arith.constant 0 : index
      %13 = vector.load %arg4[%c0_12, %c0_13] : memref<1x96xf32, #tpu.memory_space<vmem>>, vector<1x96xf32>
      %14 = vector.broadcast %13 : vector<1x96xf32> to vector<16x96xf32>
      %15 = arith.addf %12, %14 : vector<16x96xf32>
      %16 = vector.extract_strided_slice %15 {offsets = [0, 0], sizes = [16, 32], strides = [1, 1]} : vector<16x96xf32> to vector<16x32xf32>
      %c0_14 = arith.constant 0 : index
      %c0_15 = arith.constant 0 : index
      %17 = vector.load %arg5[%c0_14, %c0_15] : memref<16x32xf32, #tpu.memory_space<vmem>>, vector<16x32xf32>
      tpu.vector_store %arg5[%c0_14, %c0_15], %16 {strides = array<i32>} : memref<16x32xf32, #tpu.memory_space<vmem>>, vector<16x32xf32>,
      %18 = vector.extract_strided_slice %15 {offsets = [0, 32], sizes = [16, 32], strides = [1, 1]} : vector<16x96xf32> to vector<16x32xf32>
      %c0_16 = arith.constant 0 : index
      %c0_17 = arith.constant 0 : index
      %19 = vector.load %arg6[%c0_16, %c0_17] : memref<16x32xf32, #tpu.memory_space<vmem>>, vector<16x32xf32>
      tpu.vector_store %arg6[%c0_16, %c0_17], %18 {strides = array<i32>} : memref<16x32xf32, #tpu.memory_space<vmem>>, vector<16x32xf32>,
      %20 = vector.extract_strided_slice %15 {offsets = [0, 64], sizes = [16, 32], strides = [1, 1]} : vector<16x96xf32> to vector<16x32xf32>
      %c0_18 = arith.constant 0 : index
      %c0_19 = arith.constant 0 : index
      %21 = vector.load %arg7[%c0_18, %c0_19] : memref<16x32xf32, #tpu.memory_space<vmem>>, vector<16x32xf32>
      tpu.vector_store %arg7[%c0_18, %c0_19], %20 {strides = array<i32>} : memref<16x32xf32, #tpu.memory_space<vmem>>, vector<16x32xf32>,
    } else {
    }
    return
  }
  func.func @transform_0(%arg0: i32, %arg1: i32) -> (i32, i32) {
    %c0_i32 = arith.constant 0 : i32
    return %arg0, %arg1 : i32, i32
  }
  func.func @transform_1(%arg0: i32, %arg1: i32) -> (i32, i32) {
    %c0_i32 = arith.constant 0 : i32
    %c0_i32_0 = arith.constant 0 : i32
    return %arg1, %c0_i32 : i32, i32
  }
  func.func @transform_2(%arg0: i32, %arg1: i32) -> (i32, i32) {
    %c0_i32 = arith.constant 0 : i32
    %c0_i32_0 = arith.constant 0 : i32
    %c0_i32_1 = arith.constant 0 : i32
    return %c0_i32, %c0_i32_0 : i32, i32
  }
  func.func @transform_3(%arg0: i32, %arg1: i32) -> (i32, i32) {
    %c0_i32 = arith.constant 0 : i32
    %c0_i32_0 = arith.constant 0 : i32
    return %arg0, %c0_i32 : i32, i32
  }
  func.func @transform_4(%arg0: i32, %arg1: i32) -> (i32, i32) {
    %c0_i32 = arith.constant 0 : i32
    %c0_i32_0 = arith.constant 0 : i32
    return %arg0, %c0_i32 : i32, i32
  }
  func.func @transform_5(%arg0: i32, %arg1: i32) -> (i32, i32) {
    %c0_i32 = arith.constant 0 : i32
    %c0_i32_0 = arith.constant 0 : i32
    return %arg0, %c0_i32 : i32, i32
  }
}

</mosaic_0001>

<llo_original>
// kernel: tpu_custom_call.1
$region0: #{tpu_custom_call.1}
  #allocation0 [shape = 'u32[]', space=smem, size = 0x4, offset = 0x4, fixed_abs, tag = 'smem constant byte address 0x4 - core index']
  #allocation1 [shape = 'u32[144,128]{1,0:T(1,128)}', space=vmem, size = 0x12000, scoped, tag = 'internal scratch']
  #allocation2 [shape = 'f32[16,96]{1,0:T(8,128)}', space=vmem, size = 0x2000, scoped, tag = 'scratch operand']
  %s0 = inlined_call_operand.hbm [shape: f32[16,32], index: 0, kind: input, shape index: {}]
  %s1 = inlined_call_operand.hbm [shape: f32[32,96], index: 1, kind: input, shape index: {}]
  %s2 = inlined_call_operand.vmem [shape: f32[1,96], index: 2, kind: input, shape index: {}]
  %s3 = inlined_call_operand.hbm [shape: f32[16,32], index: 3, kind: output, shape index: {0}]
  %s4 = inlined_call_operand.hbm [shape: f32[16,32], index: 4, kind: output, shape index: {1}]
  %s5 = inlined_call_operand.hbm [shape: f32[16,32], index: 5, kind: output, shape index: {2}]
  %6 = xla_tuple %s3, %s4, %s5
  %s7 = sld [smem:[#allocation0]]
  $region54: #{tpu_custom_call.1} parent=0
    _
  %s9 = ssub.s32 1, %s7
  %s10 = scalar_select 0, %s9, %s7
  $region1: #{tpu_custom_call.1} parent=0
    #allocation3 [shape = 'u8[8192]{0}', space=vmem, size = 0x2000, scoped, tag = 'input window, operand 0, single buffered']
    #allocation4 [shape = 's32[1]{0}', space=sflag, size = 0x4, scoped, tag = 'scoped memory for tpu_custom_call.1']
    #allocation5 [shape = 's32[1]{0}', space=sflag, size = 0x4, scoped, tag = 'scoped memory for tpu_custom_call.1']
    #allocation6 [shape = 'u8[16384]{0}', space=vmem, size = 0x4000, scoped, tag = 'input window, operand 1, single buffered']
    #allocation7 [shape = 's32[1]{0}', space=sflag, size = 0x4, scoped, tag = 'scoped memory for tpu_custom_call.1']
    #allocation8 [shape = 'u8[8192]{0}', space=vmem, size = 0x2000, scoped, tag = 'output window, operand 0, single buffered']
    #allocation9 [shape = 'u8[8192]{0}', space=vmem, size = 0x2000, scoped, tag = 'output window, operand 1, single buffered']
    #allocation10 [shape = 's32[1]{0}', space=sflag, size = 0x4, scoped, tag = 'scoped memory for tpu_custom_call.1']
    #allocation11 [shape = 'u8[8192]{0}', space=vmem, size = 0x2000, scoped, tag = 'output window, operand 2, single buffered']
    %11 = vsyncpa [#allocation4], 0
    %12 = vsyncpa [#allocation7], 0
    %13 = vsyncpa [#allocation5], 0
    %14 = vsyncpa [#allocation10], 0
    // Predicated region
    $region2: #{tpu_custom_call.1} parent=1 // pred_check
      _
    $region3: #{tpu_custom_call.1} parent=1 // pred_check_branch
      %16 = sbr.rel (0) target = $region5
    $region4: #{tpu_custom_call.1} parent=1 // pred_region
      %s18 = ssub.s32 256, 256
      %19 = vsyncadd [#allocation4], %s18
      %s20 = sshll.u32 [#allocation3], 4
      %s21 = int_to_ptr.vmem [resolvable:$true] %s20
      %26 = dma.hbm_to_vmem [thread:$0]  %s0, 256, %s21, [#allocation4], 128, 128, 8
    $region5: #{tpu_custom_call.1} parent=1 // pred_fallthru
      _
    // Predicated region
    $region6: #{tpu_custom_call.1} parent=1 // pred_check
      _
    $region7: #{tpu_custom_call.1} parent=1 // pred_check_branch
      %28 = sbr.rel (0) target = $region9
    $region8: #{tpu_custom_call.1} parent=1 // pred_region
      %s30 = ssub.s32 512, 512
      %31 = vsyncadd [#allocation7], %s30
      %s32 = sshll.u32 [#allocation6], 4
      %s33 = int_to_ptr.vmem [resolvable:$true] %s32
      %38 = dma.hbm_to_vmem [thread:$0]  %s1, 512, %s33, [#allocation7], 128, 128, 8
    $region9: #{tpu_custom_call.1} parent=1 // pred_fallthru
      _
    // Predicated region
    $region10: #{tpu_custom_call.1} parent=1 // pred_check
      _
    $region11: #{tpu_custom_call.1} parent=1 // pred_check_branch
      %40 = sbr.rel (0) target = $region13
    $region12: #{tpu_custom_call.1} parent=1 // pred_region
      _
    $region13: #{tpu_custom_call.1} parent=1 // pred_fallthru
      _
    // Predicated region
    $region14: #{tpu_custom_call.1} parent=1 // pred_check
      _
    $region15: #{tpu_custom_call.1} parent=1 // pred_check_branch
      %42 = sbr.rel (0) target = $region17
    $region16: #{tpu_custom_call.1} parent=1 // pred_region
      %43 = dma.done [#allocation4], 256
    $region17: #{tpu_custom_call.1} parent=1 // pred_fallthru
      _
    // Predicated region
    $region18: #{tpu_custom_call.1} parent=1 // pred_check
      _
    $region19: #{tpu_custom_call.1} parent=1 // pred_check_branch
      %45 = sbr.rel (0) target = $region21
    $region20: #{tpu_custom_call.1} parent=1 // pred_region
      %46 = dma.done [#allocation7], 512
    $region21: #{tpu_custom_call.1} parent=1 // pred_fallthru
      _
    %p47 = scmp.eq.s32.totalorder 0, 0
    // Predicated region
    $region22: #{tpu_custom_call.1} parent=1 // pred_check
      %p48 = pneg %p47
    $region23: #{tpu_custom_call.1} parent=1 // pred_check_branch
      %50 = sbr.rel (%p48) target = $region25
    $region24: #{tpu_custom_call.1} parent=1 // pred_region
      %vm51 = vcmask 785408
      %52 = vst.msk [vmem:[#allocation2] sm:$0xff] %vm51, 0.0
      %53 = vst.msk [vmem:[#allocation2 + $0x8] sm:$0xff] %vm51, 0.0
    $region25: #{tpu_custom_call.1} parent=1 // pred_fallthru
      _
    %v54 = vld [vmem:[#allocation2] sm:$0xff]
    %v55 = vld [vmem:[#allocation2 + $0x8] sm:$0xff]
    %v56 = vld [vmem:[#allocation3] sm:$0xff]
    %v57 = vld [vmem:[#allocation3 + $0x8] sm:$0xff]
    %v58 = vld [vmem:[#allocation6] sm:$0xff]
    %v59 = vld [vmem:[#allocation6 + $0x8] sm:$0xff]
    %v60 = vld [vmem:[#allocation6 + $0x10] sm:$0xff]
    %v61 = vld [vmem:[#allocation6 + $0x18] sm:$0xff]
    %vm62 = vcmask 261120
    %v64 = vsel %vm62, %v56, 0
    %v67 = vsel %vm62, %v57, 0
    %69 = vmatprep.subr.mxu0 0.0
    %70 = vmatpush1.msra.mxu0 0.0
    %71 = vmatprep.subr.mxu0 0.0
    %72 = vmatpush1.msra.mxu0 0.0
    %73 = vmatprep.subr.mxu0 0.0
    %74 = vmatpush1.msra.mxu0 0.0
    %75 = vmatprep.subr.mxu0 0.0
    %76 = vmatpush1.msra.mxu0 0.0
    %77 = vmatprep.subr.mxu0 0.0
    %78 = vmatpush1.msra.mxu0 0.0
    %79 = vmatprep.subr.mxu0 0.0
    %80 = vmatpush1.msra.mxu0 0.0
    %81 = vmatprep.subr.mxu0 0.0
    %82 = vmatpush1.msra.mxu0 0.0
    %83 = vmatprep.subr.mxu0 0.0
    %84 = vmatpush1.msra.mxu0 0.0
    %85 = vmatprep.subr.mxu0 0.0
    %86 = vmatpush1.msra.mxu0 0.0
    %87 = vmatprep.subr.mxu0 0.0
    %88 = vmatpush1.msra.mxu0 0.0
    %89 = vmatprep.subr.mxu0 0.0
    %90 = vmatpush1.msra.mxu0 0.0
    %91 = vmatprep.subr.mxu0 0.0
    %92 = vmatpush1.msra.mxu0 0.0
    %93 = vmatprep.subr.mxu0 0.0
    %94 = vmatpush1.msra.mxu0 %v61
    %95 = vmatprep.subr.mxu0 0.0
    %96 = vmatpush1.msra.mxu0 %v60
    %97 = vmatprep.subr.mxu0 0.0
    %98 = vmatpush1.msra.mxu0 %v59
    %99 = vmatprep.subr.mxu0 0.0
    %100 = vmatpush1.msra.mxu0 %v58
    %101 = vmatprep.subr.mxu0 0.0
    %102 = vmatpush2.msra.mxu0 0.0
    %103 = vmatprep.subr.mxu0 0.0
    %104 = vmatpush2.msra.mxu0 0.0
    %105 = vmatprep.subr.mxu0 0.0
    %106 = vmatpush2.msra.mxu0 0.0
    %107 = vmatprep.subr.mxu0 0.0
    %108 = vmatpush2.msra.mxu0 0.0
    %109 = vmatprep.subr.mxu0 0.0
    %110 = vmatpush2.msra.mxu0 0.0
    %111 = vmatprep.subr.mxu0 0.0
    %112 = vmatpush2.msra.mxu0 0.0
    %113 = vmatprep.subr.mxu0 0.0
    %114 = vmatpush2.msra.mxu0 0.0
    %115 = vmatprep.subr.mxu0 0.0
    %116 = vmatpush2.msra.mxu0 0.0
    %117 = vmatprep.subr.mxu0 0.0
    %118 = vmatpush2.msra.mxu0 0.0
    %119 = vmatprep.subr.mxu0 0.0
    %120 = vmatpush2.msra.mxu0 0.0
    %121 = vmatprep.subr.mxu0 0.0
    %122 = vmatpush2.msra.mxu0 0.0
    %123 = vmatprep.subr.mxu0 0.0
    %124 = vmatpush2.msra.mxu0 0.0
    %125 = vmatprep.subr.mxu0 0.0
    %126 = vmatpush2.msra.mxu0 0.0
    %127 = vmatprep.subr.mxu0 0.0
    %128 = vmatpush2.msra.mxu0 0.0
    %129 = vmatprep.subr.mxu0 0.0
    %130 = vmatpush2.msra.mxu0 0.0
    %131 = vmatprep.subr.mxu0 0.0
    %132 = vmatpush2.msra.mxu0 0.0
    %133 = vmatprep.mubr.f32.mxu0 0.0
    %134 = vmatmul.mubr.f32.gmra.mxu0 %v64
    %v135 = vpop.f32.mrf.mxu0
    %v136 = vadd.f32 0.0, %v135
    %v137 = vpop.f32.mrf.mxu0
    %138 = vmatprep.mubr.f32.mxu0 0.0
    %139 = vmatmul.mubr.f32.gmra.mxu0 %v67
    %v140 = vpop.f32.mrf.mxu0
    %v141 = vadd.f32 0.0, %v140
    %v142 = vpop.f32.mrf.mxu0
    %143 = vdwg.mxu0
    %v144 = vadd.f32 %v54, %v136
    %v145 = vadd.f32 %v55, %v141
    %vm146 = vcmask 785408
    %147 = vst.msk [vmem:[#allocation2] sm:$0xff] %vm146, %v144
    %148 = vst.msk [vmem:[#allocation2 + $0x8] sm:$0xff] %vm146, %v145
    // Predicated region
    $region26: #{tpu_custom_call.1} parent=1 // pred_check
      %p149 = pneg %p47
    $region27: #{tpu_custom_call.1} parent=1 // pred_check_branch
      %151 = sbr.rel (%p149) target = $region29
    $region28: #{tpu_custom_call.1} parent=1 // pred_region
      %v152 = vld [vmem:[#allocation2] sm:$0xff]
      %v153 = vld [vmem:[#allocation2 + $0x8] sm:$0xff]
      %v154 = vld [vmem:[%s2] sm:$0x1]
      %v156 = vlaneseq
      %v157 = vshrl.u32 %v156, 7
      %v158 = vsub.s32 0, %v157
      %v159 = vrot.slane %v154, %v158
      %v161 = vadd.f32 %v152, %v159
      %v162 = vadd.f32 %v153, %v159
      %163 = vst.msk [vmem:[#allocation8] sm:$0xff] %vm62, %v161
      %164 = vst.msk [vmem:[#allocation8 + $0x8] sm:$0xff] %vm62, %v162
      %167 = vrot.lane.b32.xlu0 %v161, 96
      %v168 = vpop.permute.xlu0 %167
      %169 = vrot.lane.b32.xlu0 %v162, 96
      %v170 = vpop.permute.xlu0 %169
      %173 = vst.msk [vmem:[#allocation9] sm:$0xff] %vm62, %v168
      %174 = vst.msk [vmem:[#allocation9 + $0x8] sm:$0xff] %vm62, %v170
      %175 = vrot.lane.b32.xlu0 %v161, 64
      %v176 = vpop.permute.xlu0 %175
      %177 = vrot.lane.b32.xlu0 %v162, 64
      %v178 = vpop.permute.xlu0 %177
      %181 = vst.msk [vmem:[#allocation11] sm:$0xff] %vm62, %v176
      %182 = vst.msk [vmem:[#allocation11 + $0x8] sm:$0xff] %vm62, %v178
    $region29: #{tpu_custom_call.1} parent=1 // pred_fallthru
      _
    // Predicated region
    $region30: #{tpu_custom_call.1} parent=1 // pred_check
      _
    $region31: #{tpu_custom_call.1} parent=1 // pred_check_branch
      %184 = sbr.rel (0) target = $region33
    $region32: #{tpu_custom_call.1} parent=1 // pred_region
      %s186 = ssub.s32 256, 256
      %187 = vsyncadd [#allocation5], %s186
      %s188 = sshll.u32 [#allocation8], 4
      %s189 = int_to_ptr.vmem [resolvable:$true] %s188
      %194 = dma.vmem_to_hbm [thread:$0]  %s189, 256, %s3, [#allocation5], 128, 128, 8
    $region33: #{tpu_custom_call.1} parent=1 // pred_fallthru
      _
    // Predicated region
    $region34: #{tpu_custom_call.1} parent=1 // pred_check
      _
    $region35: #{tpu_custom_call.1} parent=1 // pred_check_branch
      %196 = sbr.rel (0) target = $region37
    $region36: #{tpu_custom_call.1} parent=1 // pred_region
      %s198 = ssub.s32 256, 256
      %199 = vsyncadd [#allocation10], %s198
      %s200 = sshll.u32 [#allocation9], 4
      %s201 = int_to_ptr.vmem [resolvable:$true] %s200
      %206 = dma.vmem_to_hbm [thread:$0]  %s201, 256, %s4, [#allocation10], 128, 128, 8
    $region37: #{tpu_custom_call.1} parent=1 // pred_fallthru
      _
    // Predicated region
    $region38: #{tpu_custom_call.1} parent=1 // pred_check
      _
    $region39: #{tpu_custom_call.1} parent=1 // pred_check_branch
      %208 = sbr.rel (0) target = $region41
    $region40: #{tpu_custom_call.1} parent=1 // pred_region
      %s210 = ssub.s32 256, 256
      %211 = vsyncadd [#allocation10], %s210
      %s212 = sshll.u32 [#allocation11], 4
      %s213 = int_to_ptr.vmem [resolvable:$true] %s212
      %218 = dma.vmem_to_hbm [thread:$0]  %s213, 256, %s5, [#allocation10], 128, 128, 8
    $region41: #{tpu_custom_call.1} parent=1 // pred_fallthru
      _
    // Predicated region
    $region42: #{tpu_custom_call.1} parent=1 // pred_check
      _
    $region43: #{tpu_custom_call.1} parent=1 // pred_check_branch
      %220 = sbr.rel (0) target = $region45
    $region44: #{tpu_custom_call.1} parent=1 // pred_region
      %221 = dma.done [#allocation5], 256
    $region45: #{tpu_custom_call.1} parent=1 // pred_fallthru
      _
    // Predicated region
    $region46: #{tpu_custom_call.1} parent=1 // pred_check
      _
    $region47: #{tpu_custom_call.1} parent=1 // pred_check_branch
      %223 = sbr.rel (0) target = $region49
    $region48: #{tpu_custom_call.1} parent=1 // pred_region
      %224 = dma.done [#allocation10], 256
    $region49: #{tpu_custom_call.1} parent=1 // pred_fallthru
      _
    // Predicated region
    $region50: #{tpu_custom_call.1} parent=1 // pred_check
      _
    $region51: #{tpu_custom_call.1} parent=1 // pred_check_branch
      %226 = sbr.rel (0) target = $region53
    $region52: #{tpu_custom_call.1} parent=1 // pred_region
      %227 = dma.done [#allocation10], 256
    $region53: #{tpu_custom_call.1} parent=1 // pred_fallthru
      _
    %228 = vsyncpa [#allocation4], 1
    %229 = vsyncpa [#allocation7], 1
    %230 = vsyncpa [#allocation5], 1
    %231 = vsyncpa [#allocation10], 1

</llo_original>
